<compile_context>
chip_gen: v6e
topology: v6e:2x2x1
jax: 0.10.0
libtpu: 0.0.40
codegen_flags: <defaults>
</compile_context>

<pallas_src>
import functools

import jax
import jax.numpy as jnp
from jax.experimental import pallas as pl
from jax.experimental.pallas import tpu as pltpu

LANE = 128   # feature dims padded to lane width for dense vregs / vst
TILE = 256   # node tile (rows and contraction); fits v5e/v6e/v7x VMEM budgets


def _round_up(n, m):
    return (n + m - 1) // m * m


def _pad2d(a, rows, cols):
    r, c = a.shape
    return jnp.pad(a, ((0, rows - r), (0, cols - c)))


# ---------------------------------------------------------------------------
# Kernel 1: one GraphConv layer.
#   out_i = relu?( [ (adj @ h)_i , h_i ] @ [[W_rel],[W_root]] + b )
# grid = (N/TILE row tiles, N/TILE contraction tiles); adj streamed as bf16
# blocks, f32 accumulator in scratch, fused weight/bias/relu epilogue at the
# last contraction step.
# ---------------------------------------------------------------------------
def graph_conv_kernel(adj_ref, h_agg_ref, h_root_ref, w_ref, b_ref,
                      out_ref, acc_ref, *, apply_relu):
    k = pl.program_id(1)

    @pl.when(k == 0)
    def _():
        acc_ref[...] = jnp.zeros_like(acc_ref)

    # neighbor sum aggregation: bf16 MXU matmul, f32 accumulation
    acc_ref[...] += jnp.dot(adj_ref[...], h_agg_ref[...],
                            preferred_element_type=jnp.float32)

    @pl.when(k == pl.num_programs(1) - 1)
    def _():
        # fused rel/root matmul: concat(agg, x_root) @ W_stack  (doubles K)
        hcat = jnp.concatenate([acc_ref[...], h_root_ref[...]], axis=-1)
        out = jnp.dot(hcat, w_ref[...], preferred_element_type=jnp.float32)
        out = out + b_ref[...]
        if apply_relu:
            out = jnp.maximum(out, 0.0)
        out_ref[...] = out.astype(out_ref.dtype)


def graph_conv(adj_bf16, h_f32, w_stack, bias, *, apply_relu):
    n_pad, c_in = h_f32.shape
    c_out = w_stack.shape[1]
    grid = (n_pad // TILE, n_pad // TILE)
    h_bf16 = h_f32.astype(jnp.bfloat16)   # bf16 operand for the aggregation

    kernel = functools.partial(graph_conv_kernel, apply_relu=apply_relu)
    return pl.pallas_call(
        kernel,
        out_shape=jax.ShapeDtypeStruct((n_pad, c_out), jnp.float32),
        grid_spec=pltpu.PrefetchScalarGridSpec(
            num_scalar_prefetch=0,
            grid=grid,
            in_specs=[
                pl.BlockSpec((TILE, TILE), lambda i, k: (i, k)),      # adj tile (bf16)
                pl.BlockSpec((TILE, c_in), lambda i, k: (k, 0)),      # h rows for agg (bf16)
                pl.BlockSpec((TILE, c_in), lambda i, k: (i, 0)),      # h rows for root (f32)
                pl.BlockSpec((2 * c_in, c_out), lambda i, k: (0, 0)),  # stacked weights
                pl.BlockSpec((1, c_out), lambda i, k: (0, 0)),         # bias (lane-padded)
            ],
            out_specs=pl.BlockSpec((TILE, c_out), lambda i, k: (i, 0)),
            scratch_shapes=[pltpu.VMEM((TILE, c_in), jnp.float32)],
        ),
        compiler_params=pltpu.CompilerParams(
            dimension_semantics=("parallel", "arbitrary"),
            vmem_limit_bytes=48 * 1024 * 1024,   # headroom for v7x's 64 MiB VMEM
        ),
    )(adj_bf16, h_bf16, h_f32, w_stack, bias)


# ---------------------------------------------------------------------------
# Kernel 2: global_mean_pool + final Linear (tiny: G x N and N x 128 operands).
# ---------------------------------------------------------------------------
def pool_linear_kernel(pool_ref, h_ref, wl_ref, bl_ref, out_ref):
    pooled = jnp.dot(pool_ref[...], h_ref[...],
                     preferred_element_type=jnp.float32)        # [G, C]
    out_ref[...] = (jnp.dot(pooled, wl_ref[...],
                            preferred_element_type=jnp.float32)
                    + bl_ref[...])


def pool_linear(pool_f32, h_f32, w_lin, b_lin):
    g = pool_f32.shape[0]
    c_out = w_lin.shape[1]
    vmem = pl.BlockSpec(memory_space=pltpu.MemorySpace.VMEM)
    return pl.pallas_call(
        pool_linear_kernel,
        out_shape=jax.ShapeDtypeStruct((g, c_out), jnp.float32),
        in_specs=[vmem] * 4,
        out_specs=vmem,
        compiler_params=pltpu.CompilerParams(vmem_limit_bytes=48 * 1024 * 1024),
    )(pool_f32, h_f32, w_lin, b_lin)


# ---------------------------------------------------------------------------
# Forward wrapper.  num_graphs is a static Python int (jit-safe).
# ---------------------------------------------------------------------------
def gcn_forward(x, edge_index, batch, num_graphs, params):
    """x: [N, C_in] f32, edge_index: [2, E] i32 (row0=src j, row1=dst i),
    batch: [N] i32 graph ids, num_graphs: static int.  Returns [G, C_out]."""
    n, c_in = x.shape
    hidden = params["w1_rel"].shape[1]
    c_out = params["w_lin"].shape[1]

    n_pad = _round_up(max(n, TILE), TILE)
    c_in_p = _round_up(c_in, LANE)
    hid_p = _round_up(hidden, LANE)
    c_out_p = _round_up(c_out, LANE)

    # --- plain-JAX glue: padded dense adjacency (bf16) and mean-pool matrix ---
    src, dst = edge_index[0], edge_index[1]
    adj = (jnp.zeros((n_pad, n_pad), jnp.float32)
           .at[dst, src].add(1.0)).astype(jnp.bfloat16)  # exact for counts <= 256

    node_ids = jnp.arange(n_pad)
    batch_pad = jnp.where(node_ids < n, jnp.pad(batch, (0, n_pad - n)), -1)
    one_hot = (batch_pad[None, :]
               == jnp.arange(num_graphs)[:, None]).astype(jnp.float32)
    counts = jnp.maximum(one_hot.sum(axis=1, keepdims=True), 1.0)
    pool = one_hot / counts                                      # [G, n_pad]

    x_p = _pad2d(x.astype(jnp.float32), n_pad, c_in_p)

    def stack_w(wr, ws, rows_in, cols_out):
        # [[W_rel], [W_root]] — matches concat(agg, x_root) in the kernel
        return jnp.concatenate([_pad2d(wr, rows_in, cols_out),
                                _pad2d(ws, rows_in, cols_out)], axis=0)

    w1 = stack_w(params["w1_rel"], params["w1_root"], c_in_p, hid_p)
    w2 = stack_w(params["w2_rel"], params["w2_root"], hid_p, hid_p)
    w3 = stack_w(params["w3_rel"], params["w3_root"], hid_p, hid_p)
    b1 = _pad2d(params["b1_rel"], 1, hid_p)
    b2 = _pad2d(params["b2_rel"], 1, hid_p)
    b3 = _pad2d(params["b3_rel"], 1, hid_p)
    wl = _pad2d(params["w_lin"], hid_p, c_out_p)
    bl = _pad2d(params["b_lin"], 1, c_out_p)

    h = graph_conv(adj, x_p, w1, b1, apply_relu=True)
    h = graph_conv(adj, h, w2, b2, apply_relu=True)
    h = graph_conv(adj, h, w3, b3, apply_relu=False)
    out = pool_linear(pool, h, wl, bl)
    return out[:, :c_out]


def init_params(key, input_channels, hidden_channels, output_channels):
    ks = jax.random.split(key, 7)

    def lin(k, fan_in, fan_out):
        bound = 1.0 / jnp.sqrt(fan_in)
        return jax.random.uniform(k, (fan_in, fan_out), jnp.float32, -bound, bound)

    return {
        "w1_rel":  lin(ks[0], input_channels, hidden_channels),
        "b1_rel":  jnp.zeros((1, hidden_channels), jnp.float32),
        "w1_root": lin(ks[1], input_channels, hidden_channels),
        "w2_rel":  lin(ks[2], hidden_channels, hidden_channels),
        "b2_rel":  jnp.zeros((1, hidden_channels), jnp.float32),
        "w2_root": lin(ks[3], hidden_channels, hidden_channels),
        "w3_rel":  lin(ks[4], hidden_channels, hidden_channels),
        "b3_rel":  jnp.zeros((1, hidden_channels), jnp.float32),
        "w3_root": lin(ks[5], hidden_channels, hidden_channels),
        "w_lin":   lin(ks[6], hidden_channels, output_channels),
        "b_lin":   jnp.zeros((1, output_channels), jnp.float32),
    }


if __name__ == "__main__":
    key = jax.random.PRNGKey(0)
    k_x, k_e, k_p = jax.random.split(key, 3)

    # small graph batch: 2 graphs x 8 nodes = 16 nodes, 4 input feats,
    # 32 hidden, 8 output classes
    N, E = 16, 40
    input_channels, hidden_channels, output_channels = 4, 32, 8
    num_graphs = 2

    x = jax.random.normal(k_x, (N, input_channels), jnp.float32)
    # deterministic random edges, kept inside each graph's node range
    ks, kd = jax.random.split(k_e)
    graph_of_edge = (jnp.arange(E) % 2)                      # half edges per graph
    src = jax.random.randint(ks, (E,), 0, 8) + 8 * graph_of_edge
    dst = jax.random.randint(kd, (E,), 0, 8) + 8 * graph_of_edge
    edge_index = jnp.stack([src, dst]).astype(jnp.int32)
    batch = (jnp.arange(N) // 8).astype(jnp.int32)           # [0..0, 1..1]

    params = init_params(k_p, input_channels, hidden_channels, output_channels)

    out = gcn_forward(x, edge_index, batch, num_graphs, params)
    jax.block_until_ready(out)
    assert out.shape == (num_graphs, output_channels)
    print("KERNEL_OK")
</pallas_src>

<mosaic_0001>
module attributes {stable_mosaic.version = 11 : i64} {
  func.func @graph_conv_kernel(%arg0: i32, %arg1: i32, %arg2: memref<256x256xbf16, #tpu.memory_space<vmem>>, %arg3: memref<256x128xbf16, #tpu.memory_space<vmem>>, %arg4: memref<256x128xf32, #tpu.memory_space<vmem>>, %arg5: memref<256x128xf32, #tpu.memory_space<vmem>>, %arg6: memref<1x128xf32, #tpu.memory_space<vmem>>, %arg7: memref<256x128xf32, #tpu.memory_space<vmem>>, %arg8: memref<256x128xf32, #tpu.memory_space<vmem>>) attributes {dimension_semantics = [#tpu.dimension_semantics<parallel>, #tpu.dimension_semantics<arbitrary>], iteration_bounds = array<i64: 1, 1>, scalar_prefetch = 0 : i64, scratch_operands = 1 : i64, tpu.core_type = #tpu.core_type<tc>, window_params = [{transform_indices = @transform_0, window_bounds = array<i64: 256, 256>}, {transform_indices = @transform_1, window_bounds = array<i64: 256, 128>}, {transform_indices = @transform_2, window_bounds = array<i64: 256, 128>}, {pipeline_mode = #tpu.pipeline_mode<synchronous>, transform_indices = @transform_3, window_bounds = array<i64: 256, 128>}, {pipeline_mode = #tpu.pipeline_mode<synchronous>, transform_indices = @transform_4, window_bounds = array<i64: 1, 128>}, {transform_indices = @transform_5, window_bounds = array<i64: 256, 128>}]} {
    %c0_i32 = arith.constant 0 : i32
    %0 = arith.cmpi eq, %arg1, %c0_i32 : i32
    %1 = arith.extui %0 : i1 to i32
    %c0_i32_0 = arith.constant 0 : i32
    %2 = arith.cmpi ne, %1, %c0_i32_0 : i32
    scf.if %2 {
      %cst_10 = arith.constant 0.000000e+00 : f32
      %12 = vector.broadcast %cst_10 : f32 to vector<256x128xf32>
      %c0_11 = arith.constant 0 : index
      %c0_12 = arith.constant 0 : index
      %13 = vector.load %arg8[%c0_11, %c0_12] : memref<256x128xf32, #tpu.memory_space<vmem>>, vector<256x128xf32>
      tpu.vector_store %arg8[%c0_11, %c0_12], %12 {strides = array<i32>} : memref<256x128xf32, #tpu.memory_space<vmem>>, vector<256x128xf32>,
    } else {
    }
    %c0 = arith.constant 0 : index
    %c0_1 = arith.constant 0 : index
    %3 = vector.load %arg8[%c0, %c0_1] : memref<256x128xf32, #tpu.memory_space<vmem>>, vector<256x128xf32>
    %c0_2 = arith.constant 0 : index
    %c0_3 = arith.constant 0 : index
    %4 = vector.load %arg2[%c0_2, %c0_3] : memref<256x256xbf16, #tpu.memory_space<vmem>>, vector<256x256xbf16>
    %c0_4 = arith.constant 0 : index
    %c0_5 = arith.constant 0 : index
    %5 = vector.load %arg3[%c0_4, %c0_5] : memref<256x128xbf16, #tpu.memory_space<vmem>>, vector<256x128xbf16>
    %cst = arith.constant dense<0.000000e+00> : vector<256x128xf32>
    %6 = tpu.matmul %4, %5, %cst {dimension_numbers = #tpu.dot_dimension_numbers<[1], [0], [0], [1], [0, 0, 1, 1], [], []>} : vector<256x256xbf16>, vector<256x128xbf16>, vector<256x128xf32> -> vector<256x128xf32>
    %7 = arith.addf %3, %6 : vector<256x128xf32>
    %c0_6 = arith.constant 0 : index
    %c0_7 = arith.constant 0 : index
    %8 = vector.load %arg8[%c0_6, %c0_7] : memref<256x128xf32, #tpu.memory_space<vmem>>, vector<256x128xf32>
    tpu.vector_store %arg8[%c0_6, %c0_7], %7 {strides = array<i32>} : memref<256x128xf32, #tpu.memory_space<vmem>>, vector<256x128xf32>,
    %c0_i32_8 = arith.constant 0 : i32
    %9 = arith.cmpi eq, %arg1, %c0_i32_8 : i32
    %10 = arith.extui %9 : i1 to i32
    %c0_i32_9 = arith.constant 0 : i32
    %11 = arith.cmpi ne, %10, %c0_i32_9 : i32
    scf.if %11 {
      %c0_10 = arith.constant 0 : index
      %c0_11 = arith.constant 0 : index
      %12 = vector.load %arg8[%c0_10, %c0_11] : memref<256x128xf32, #tpu.memory_space<vmem>>, vector<256x128xf32>
      %c0_12 = arith.constant 0 : index
      %c0_13 = arith.constant 0 : index
      %13 = vector.load %arg4[%c0_12, %c0_13] : memref<256x128xf32, #tpu.memory_space<vmem>>, vector<256x128xf32>
      %14 = tpu.concatenate %12, %13 in 1 : vector<256x128xf32>, vector<256x128xf32> -> vector<256x256xf32>
      %c0_14 = arith.constant 0 : index
      %c0_15 = arith.constant 0 : index
      %15 = vector.load %arg5[%c0_14, %c0_15] : memref<256x128xf32, #tpu.memory_space<vmem>>, vector<256x128xf32>
      %cst_16 = arith.constant dense<0.000000e+00> : vector<256x128xf32>
      %16 = tpu.matmul %14, %15, %cst_16 {dimension_numbers = #tpu.dot_dimension_numbers<[1], [0], [0], [1], [0, 0, 1, 1], [], []>} : vector<256x256xf32>, vector<256x128xf32>, vector<256x128xf32> -> vector<256x128xf32>
      %c0_17 = arith.constant 0 : index
      %c0_18 = arith.constant 0 : index
      %17 = vector.load %arg6[%c0_17, %c0_18] : memref<1x128xf32, #tpu.memory_space<vmem>>, vector<1x128xf32>
      %18 = vector.broadcast %17 : vector<1x128xf32> to vector<256x128xf32>
      %19 = arith.addf %16, %18 : vector<256x128xf32>
      %cst_19 = arith.constant 0.000000e+00 : f32
      %20 = vector.broadcast %cst_19 : f32 to vector<256x128xf32>
      %21 = arith.maximumf %19, %20 : vector<256x128xf32>
      %c0_20 = arith.constant 0 : index
      %c0_21 = arith.constant 0 : index
      %22 = vector.load %arg7[%c0_20, %c0_21] : memref<256x128xf32, #tpu.memory_space<vmem>>, vector<256x128xf32>
      tpu.vector_store %arg7[%c0_20, %c0_21], %21 {strides = array<i32>} : memref<256x128xf32, #tpu.memory_space<vmem>>, vector<256x128xf32>,
    } else {
    }
    return
  }
  func.func @transform_0(%arg0: i32, %arg1: i32) -> (i32, i32) {
    %c0_i32 = arith.constant 0 : i32
    return %arg0, %arg1 : i32, i32
  }
  func.func @transform_1(%arg0: i32, %arg1: i32) -> (i32, i32) {
    %c0_i32 = arith.constant 0 : i32
    %c0_i32_0 = arith.constant 0 : i32
    return %arg1, %c0_i32 : i32, i32
  }
  func.func @transform_2(%arg0: i32, %arg1: i32) -> (i32, i32) {
    %c0_i32 = arith.constant 0 : i32
    %c0_i32_0 = arith.constant 0 : i32
    return %arg0, %c0_i32 : i32, i32
  }
  func.func @transform_3(%arg0: i32, %arg1: i32) -> (i32, i32) {
    %c0_i32 = arith.constant 0 : i32
    %c0_i32_0 = arith.constant 0 : i32
    %c0_i32_1 = arith.constant 0 : i32
    return %c0_i32, %c0_i32_0 : i32, i32
  }
  func.func @transform_4(%arg0: i32, %arg1: i32) -> (i32, i32) {
    %c0_i32 = arith.constant 0 : i32
    %c0_i32_0 = arith.constant 0 : i32
    %c0_i32_1 = arith.constant 0 : i32
    return %c0_i32, %c0_i32_0 : i32, i32
  }
  func.func @transform_5(%arg0: i32, %arg1: i32) -> (i32, i32) {
    %c0_i32 = arith.constant 0 : i32
    %c0_i32_0 = arith.constant 0 : i32
    return %arg0, %c0_i32 : i32, i32
  }
}

</mosaic_0001>

<llo_original>
// kernel: tpu_custom_call.1
$region0: #{tpu_custom_call.1}
  #allocation0 [shape = 'u32[]', space=smem, size = 0x4, offset = 0x4, fixed_abs, tag = 'smem constant byte address 0x4 - core index']
  #allocation1 [shape = 'u32[144,128]{1,0:T(1,128)}', space=vmem, size = 0x12000, scoped, tag = 'internal scratch']
  #allocation2 [shape = 'f32[256,128]{1,0:T(8,128)}', space=vmem, size = 0x20000, scoped, tag = 'scratch operand']
  %s0 = inlined_call_operand.hbm [shape: bf16[256,256], index: 0, kind: input, shape index: {}]
  %s1 = inlined_call_operand.hbm [shape: bf16[256,128], index: 1, kind: input, shape index: {}]
  %s2 = inlined_call_operand.hbm [shape: f32[256,128], index: 2, kind: input, shape index: {}]
  %s3 = inlined_call_operand.hbm [shape: f32[256,128], index: 3, kind: input, shape index: {}]
  %s4 = inlined_call_operand.vmem [shape: f32[1,128], index: 4, kind: input, shape index: {}]
  %s5 = inlined_call_operand.hbm [shape: f32[256,128], index: 5, kind: output, shape index: {}]
  %s6 = sld [smem:[#allocation0]]
  $region54: #{tpu_custom_call.1} parent=0
    _
  %s8 = ssub.s32 1, %s6
  %s9 = scalar_select 0, %s8, %s6
  $region1: #{tpu_custom_call.1} parent=0
    #allocation3 [shape = 'u8[131072]{0}', space=vmem, size = 0x20000, scoped, tag = 'input window, operand 0, single buffered']
    #allocation4 [shape = 's32[1]{0}', space=sflag, size = 0x4, scoped, tag = 'scoped memory for tpu_custom_call.1']
    #allocation5 [shape = 's32[1]{0}', space=sflag, size = 0x4, scoped, tag = 'scoped memory for tpu_custom_call.1']
    #allocation6 [shape = 'u8[65536]{0}', space=vmem, size = 0x10000, scoped, tag = 'input window, operand 1, single buffered']
    #allocation7 [shape = 's32[1]{0}', space=sflag, size = 0x4, scoped, tag = 'scoped memory for tpu_custom_call.1']
    #allocation8 [shape = 'u8[131072]{0}', space=vmem, size = 0x20000, scoped, tag = 'input window, operand 2, single buffered']
    #allocation9 [shape = 'u8[131072]{0}', space=vmem, size = 0x20000, scoped, tag = 'input window, operand 3, single buffered']
    #allocation10 [shape = 's32[1]{0}', space=sflag, size = 0x4, scoped, tag = 'scoped memory for tpu_custom_call.1']
    #allocation11 [shape = 'u8[131072]{0}', space=vmem, size = 0x20000, scoped, tag = 'output window, operand 0, single buffered']
    %10 = vsyncpa [#allocation4], 0
    %11 = vsyncpa [#allocation7], 0
    %12 = vsyncpa [#allocation10], 0
    %13 = vsyncpa [#allocation5], 0
    // Predicated region
    $region2: #{tpu_custom_call.1} parent=1 // pred_check
      _
    $region3: #{tpu_custom_call.1} parent=1 // pred_check_branch
      %15 = sbr.rel (0) target = $region5
    $region4: #{tpu_custom_call.1} parent=1 // pred_region
      %s17 = ssub.s32 4096, 4096
      %18 = vsyncadd [#allocation4], %s17
      %s19 = sshll.u32 [#allocation3], 4
      %s20 = int_to_ptr.vmem [resolvable:$true] %s19
      %25 = dma.hbm_to_vmem [thread:$0]  %s0, 4096, %s20, [#allocation4], 128, 128, 8
    $region5: #{tpu_custom_call.1} parent=1 // pred_fallthru
      _
    // Predicated region
    $region6: #{tpu_custom_call.1} parent=1 // pred_check
      _
    $region7: #{tpu_custom_call.1} parent=1 // pred_check_branch
      %27 = sbr.rel (0) target = $region9
    $region8: #{tpu_custom_call.1} parent=1 // pred_region
      %s29 = ssub.s32 2048, 2048
      %30 = vsyncadd [#allocation7], %s29
      %s31 = sshll.u32 [#allocation6], 4
      %s32 = int_to_ptr.vmem [resolvable:$true] %s31
      %37 = dma.hbm_to_vmem [thread:$0]  %s1, 2048, %s32, [#allocation7], 64, 64, 4
    $region9: #{tpu_custom_call.1} parent=1 // pred_fallthru
      _
    // Predicated region
    $region10: #{tpu_custom_call.1} parent=1 // pred_check
      _
    $region11: #{tpu_custom_call.1} parent=1 // pred_check_branch
      %39 = sbr.rel (0) target = $region13
    $region12: #{tpu_custom_call.1} parent=1 // pred_region
      %s41 = ssub.s32 4096, 4096
      %42 = vsyncadd [#allocation7], %s41
      %s43 = sshll.u32 [#allocation8], 4
      %s44 = int_to_ptr.vmem [resolvable:$true] %s43
      %49 = dma.hbm_to_vmem [thread:$0]  %s2, 4096, %s44, [#allocation7], 128, 128, 8
    $region13: #{tpu_custom_call.1} parent=1 // pred_fallthru
      _
    // Predicated region
    $region14: #{tpu_custom_call.1} parent=1 // pred_check
      _
    $region15: #{tpu_custom_call.1} parent=1 // pred_check_branch
      %51 = sbr.rel (0) target = $region17
    $region16: #{tpu_custom_call.1} parent=1 // pred_region
      %s53 = ssub.s32 4096, 4096
      %54 = vsyncadd [#allocation10], %s53
      %s55 = sshll.u32 [#allocation9], 4
      %s56 = int_to_ptr.vmem [resolvable:$true] %s55
      %61 = dma.hbm_to_vmem [thread:$0]  %s3, 4096, %s56, [#allocation10], 128, 128, 8
    $region17: #{tpu_custom_call.1} parent=1 // pred_fallthru
      _
    // Predicated region
    $region18: #{tpu_custom_call.1} parent=1 // pred_check
      _
    $region19: #{tpu_custom_call.1} parent=1 // pred_check_branch
      %63 = sbr.rel (0) target = $region21
    $region20: #{tpu_custom_call.1} parent=1 // pred_region
      _
    $region21: #{tpu_custom_call.1} parent=1 // pred_fallthru
      _
    // Predicated region
    $region22: #{tpu_custom_call.1} parent=1 // pred_check
      _
    $region23: #{tpu_custom_call.1} parent=1 // pred_check_branch
      %65 = sbr.rel (0) target = $region25
    $region24: #{tpu_custom_call.1} parent=1 // pred_region
      %66 = dma.done [#allocation4], 4096
    $region25: #{tpu_custom_call.1} parent=1 // pred_fallthru
      _
    // Predicated region
    $region26: #{tpu_custom_call.1} parent=1 // pred_check
      _
    $region27: #{tpu_custom_call.1} parent=1 // pred_check_branch
      %68 = sbr.rel (0) target = $region29
    $region28: #{tpu_custom_call.1} parent=1 // pred_region
      %69 = dma.done [#allocation7], 2048
    $region29: #{tpu_custom_call.1} parent=1 // pred_fallthru
      _
    // Predicated region
    $region30: #{tpu_custom_call.1} parent=1 // pred_check
      _
    $region31: #{tpu_custom_call.1} parent=1 // pred_check_branch
      %71 = sbr.rel (0) target = $region33
    $region32: #{tpu_custom_call.1} parent=1 // pred_region
      %72 = dma.done [#allocation7], 4096
    $region33: #{tpu_custom_call.1} parent=1 // pred_fallthru
      _
    // Predicated region
    $region34: #{tpu_custom_call.1} parent=1 // pred_check
      _
    $region35: #{tpu_custom_call.1} parent=1 // pred_check_branch
      %74 = sbr.rel (0) target = $region37
    $region36: #{tpu_custom_call.1} parent=1 // pred_region
      %75 = dma.done [#allocation10], 4096
    $region37: #{tpu_custom_call.1} parent=1 // pred_fallthru
      _
    %p77 = scmp.eq.s32.totalorder 0, 0
    // Predicated region
    $region38: #{tpu_custom_call.1} parent=1 // pred_check
      %p78 = pneg %p77
    $region39: #{tpu_custom_call.1} parent=1 // pred_check_branch
      %80 = sbr.rel (%p78) target = $region41
    $region40: #{tpu_custom_call.1} parent=1 // pred_region
      %81 = vst [vmem:[#allocation2] sm:$0xff] 0.0
      %82 = vst [vmem:[#allocation2 + $0x8] sm:$0xff] 0.0
      %83 = vst [vmem:[#allocation2 + $0x10] sm:$0xff] 0.0
      %84 = vst [vmem:[#allocation2 + $0x18] sm:$0xff] 0.0
      %85 = vst [vmem:[#allocation2 + $0x20] sm:$0xff] 0.0
      %86 = vst [vmem:[#allocation2 + $0x28] sm:$0xff] 0.0
      %87 = vst [vmem:[#allocation2 + $0x30] sm:$0xff] 0.0
      %88 = vst [vmem:[#allocation2 + $0x38] sm:$0xff] 0.0
      %89 = vst [vmem:[#allocation2 + $0x40] sm:$0xff] 0.0
      %90 = vst [vmem:[#allocation2 + $0x48] sm:$0xff] 0.0
      %91 = vst [vmem:[#allocation2 + $0x50] sm:$0xff] 0.0
      %92 = vst [vmem:[#allocation2 + $0x58] sm:$0xff] 0.0
      %93 = vst [vmem:[#allocation2 + $0x60] sm:$0xff] 0.0
      %94 = vst [vmem:[#allocation2 + $0x68] sm:$0xff] 0.0
      %95 = vst [vmem:[#allocation2 + $0x70] sm:$0xff] 0.0
      %96 = vst [vmem:[#allocation2 + $0x78] sm:$0xff] 0.0
      %97 = vst [vmem:[#allocation2 + $0x80] sm:$0xff] 0.0
      %98 = vst [vmem:[#allocation2 + $0x88] sm:$0xff] 0.0
      %99 = vst [vmem:[#allocation2 + $0x90] sm:$0xff] 0.0
      %100 = vst [vmem:[#allocation2 + $0x98] sm:$0xff] 0.0
      %101 = vst [vmem:[#allocation2 + $0xa0] sm:$0xff] 0.0
      %102 = vst [vmem:[#allocation2 + $0xa8] sm:$0xff] 0.0
      %103 = vst [vmem:[#allocation2 + $0xb0] sm:$0xff] 0.0
      %104 = vst [vmem:[#allocation2 + $0xb8] sm:$0xff] 0.0
      %105 = vst [vmem:[#allocation2 + $0xc0] sm:$0xff] 0.0
      %106 = vst [vmem:[#allocation2 + $0xc8] sm:$0xff] 0.0
      %107 = vst [vmem:[#allocation2 + $0xd0] sm:$0xff] 0.0
      %108 = vst [vmem:[#allocation2 + $0xd8] sm:$0xff] 0.0
      %109 = vst [vmem:[#allocation2 + $0xe0] sm:$0xff] 0.0
      %110 = vst [vmem:[#allocation2 + $0xe8] sm:$0xff] 0.0
      %111 = vst [vmem:[#allocation2 + $0xf0] sm:$0xff] 0.0
      %112 = vst [vmem:[#allocation2 + $0xf8] sm:$0xff] 0.0
    $region41: #{tpu_custom_call.1} parent=1 // pred_fallthru
      _
    %v113 = vld [vmem:[#allocation2] sm:$0xff]
    %v114 = vld [vmem:[#allocation2 + $0x8] sm:$0xff]
    %v115 = vld [vmem:[#allocation2 + $0x10] sm:$0xff]
    %v116 = vld [vmem:[#allocation2 + $0x18] sm:$0xff]
    %v117 = vld [vmem:[#allocation2 + $0x20] sm:$0xff]
    %v118 = vld [vmem:[#allocation2 + $0x28] sm:$0xff]
    %v119 = vld [vmem:[#allocation2 + $0x30] sm:$0xff]
    %v120 = vld [vmem:[#allocation2 + $0x38] sm:$0xff]
    %v121 = vld [vmem:[#allocation2 + $0x40] sm:$0xff]
    %v122 = vld [vmem:[#allocation2 + $0x48] sm:$0xff]
    %v123 = vld [vmem:[#allocation2 + $0x50] sm:$0xff]
    %v124 = vld [vmem:[#allocation2 + $0x58] sm:$0xff]
    %v125 = vld [vmem:[#allocation2 + $0x60] sm:$0xff]
    %v126 = vld [vmem:[#allocation2 + $0x68] sm:$0xff]
    %v127 = vld [vmem:[#allocation2 + $0x70] sm:$0xff]
    %v128 = vld [vmem:[#allocation2 + $0x78] sm:$0xff]
    %v129 = vld [vmem:[#allocation2 + $0x80] sm:$0xff]
    %v130 = vld [vmem:[#allocation2 + $0x88] sm:$0xff]
    %v131 = vld [vmem:[#allocation2 + $0x90] sm:$0xff]
    %v132 = vld [vmem:[#allocation2 + $0x98] sm:$0xff]
    %v133 = vld [vmem:[#allocation2 + $0xa0] sm:$0xff]
    %v134 = vld [vmem:[#allocation2 + $0xa8] sm:$0xff]
    %v135 = vld [vmem:[#allocation2 + $0xb0] sm:$0xff]
    %v136 = vld [vmem:[#allocation2 + $0xb8] sm:$0xff]
    %v137 = vld [vmem:[#allocation2 + $0xc0] sm:$0xff]
    %v138 = vld [vmem:[#allocation2 + $0xc8] sm:$0xff]
    %v139 = vld [vmem:[#allocation2 + $0xd0] sm:$0xff]
    %v140 = vld [vmem:[#allocation2 + $0xd8] sm:$0xff]
    %v141 = vld [vmem:[#allocation2 + $0xe0] sm:$0xff]
    %v142 = vld [vmem:[#allocation2 + $0xe8] sm:$0xff]
    %v143 = vld [vmem:[#allocation2 + $0xf0] sm:$0xff]
    %v144 = vld [vmem:[#allocation2 + $0xf8] sm:$0xff]
    %v145 = vld [vmem:[#allocation3] sm:$0xff]
    %v146 = vld [vmem:[#allocation3 + $0x8] sm:$0xff]
    %v147 = vld [vmem:[#allocation3 + $0x10] sm:$0xff]
    %v148 = vld [vmem:[#allocation3 + $0x18] sm:$0xff]
    %v149 = vld [vmem:[#allocation3 + $0x20] sm:$0xff]
    %v150 = vld [vmem:[#allocation3 + $0x28] sm:$0xff]
    %v151 = vld [vmem:[#allocation3 + $0x30] sm:$0xff]
    %v152 = vld [vmem:[#allocation3 + $0x38] sm:$0xff]
    %v153 = vld [vmem:[#allocation3 + $0x40] sm:$0xff]
    %v154 = vld [vmem:[#allocation3 + $0x48] sm:$0xff]
    %v155 = vld [vmem:[#allocation3 + $0x50] sm:$0xff]
    %v156 = vld [vmem:[#allocation3 + $0x58] sm:$0xff]
    %v157 = vld [vmem:[#allocation3 + $0x60] sm:$0xff]
    %v158 = vld [vmem:[#allocation3 + $0x68] sm:$0xff]
    %v159 = vld [vmem:[#allocation3 + $0x70] sm:$0xff]
    %v160 = vld [vmem:[#allocation3 + $0x78] sm:$0xff]
    %v161 = vld [vmem:[#allocation3 + $0x80] sm:$0xff]
    %v162 = vld [vmem:[#allocation3 + $0x88] sm:$0xff]
    %v163 = vld [vmem:[#allocation3 + $0x90] sm:$0xff]
    %v164 = vld [vmem:[#allocation3 + $0x98] sm:$0xff]
    %v165 = vld [vmem:[#allocation3 + $0xa0] sm:$0xff]
    %v166 = vld [vmem:[#allocation3 + $0xa8] sm:$0xff]
    %v167 = vld [vmem:[#allocation3 + $0xb0] sm:$0xff]
    %v168 = vld [vmem:[#allocation3 + $0xb8] sm:$0xff]
    %v169 = vld [vmem:[#allocation3 + $0xc0] sm:$0xff]
    %v170 = vld [vmem:[#allocation3 + $0xc8] sm:$0xff]
    %v171 = vld [vmem:[#allocation3 + $0xd0] sm:$0xff]
    %v172 = vld [vmem:[#allocation3 + $0xd8] sm:$0xff]
    %v173 = vld [vmem:[#allocation3 + $0xe0] sm:$0xff]
    %v174 = vld [vmem:[#allocation3 + $0xe8] sm:$0xff]
    %v175 = vld [vmem:[#allocation3 + $0xf0] sm:$0xff]
    %v176 = vld [vmem:[#allocation3 + $0xf8] sm:$0xff]
    %v177 = vld [vmem:[#allocation6] sm:$0xf]
    %v178 = vld [vmem:[#allocation6 + $0x4] sm:$0xf]
    %v179 = vld [vmem:[#allocation6 + $0x8] sm:$0xf]
    %v180 = vld [vmem:[#allocation6 + $0xc] sm:$0xf]
    %v181 = vld [vmem:[#allocation6 + $0x10] sm:$0xf]
    %v182 = vld [vmem:[#allocation6 + $0x14] sm:$0xf]
    %v183 = vld [vmem:[#allocation6 + $0x18] sm:$0xf]
    %v184 = vld [vmem:[#allocation6 + $0x1c] sm:$0xf]
    %v185 = vld [vmem:[#allocation6 + $0x20] sm:$0xf]
    %v186 = vld [vmem:[#allocation6 + $0x24] sm:$0xf]
    %v187 = vld [vmem:[#allocation6 + $0x28] sm:$0xf]
    %v188 = vld [vmem:[#allocation6 + $0x2c] sm:$0xf]
    %v189 = vld [vmem:[#allocation6 + $0x30] sm:$0xf]
    %v190 = vld [vmem:[#allocation6 + $0x34] sm:$0xf]
    %v191 = vld [vmem:[#allocation6 + $0x38] sm:$0xf]
    %v192 = vld [vmem:[#allocation6 + $0x3c] sm:$0xf]
    %v193 = vld [vmem:[#allocation6 + $0x40] sm:$0xf]
    %v194 = vld [vmem:[#allocation6 + $0x44] sm:$0xf]
    %v195 = vld [vmem:[#allocation6 + $0x48] sm:$0xf]
    %v196 = vld [vmem:[#allocation6 + $0x4c] sm:$0xf]
    %v197 = vld [vmem:[#allocation6 + $0x50] sm:$0xf]
    %v198 = vld [vmem:[#allocation6 + $0x54] sm:$0xf]
    %v199 = vld [vmem:[#allocation6 + $0x58] sm:$0xf]
    %v200 = vld [vmem:[#allocation6 + $0x5c] sm:$0xf]
    %v201 = vld [vmem:[#allocation6 + $0x60] sm:$0xf]
    %v202 = vld [vmem:[#allocation6 + $0x64] sm:$0xf]
    %v203 = vld [vmem:[#allocation6 + $0x68] sm:$0xf]
    %v204 = vld [vmem:[#allocation6 + $0x6c] sm:$0xf]
    %v205 = vld [vmem:[#allocation6 + $0x70] sm:$0xf]
    %v206 = vld [vmem:[#allocation6 + $0x74] sm:$0xf]
    %v207 = vld [vmem:[#allocation6 + $0x78] sm:$0xf]
    %v208 = vld [vmem:[#allocation6 + $0x7c] sm:$0xf]
    %v241 = vunpack.c.l.b16 %v145
    %v242 = vunpack.c.h.b16 %v145
    %v243 = vunpack.c.l.b16 %v146
    %v244 = vunpack.c.h.b16 %v146
    %v245 = vunpack.c.l.b16 %v147
    %v246 = vunpack.c.h.b16 %v147
    %v247 = vunpack.c.l.b16 %v148
    %v248 = vunpack.c.h.b16 %v148
    %v249 = vunpack.c.l.b16 %v149
    %v250 = vunpack.c.h.b16 %v149
    %v251 = vunpack.c.l.b16 %v150
    %v252 = vunpack.c.h.b16 %v150
    %v253 = vunpack.c.l.b16 %v151
    %v254 = vunpack.c.h.b16 %v151
    %v255 = vunpack.c.l.b16 %v152
    %v256 = vunpack.c.h.b16 %v152
    %v257 = vunpack.c.l.b16 %v153
    %v258 = vunpack.c.h.b16 %v153
    %v259 = vunpack.c.l.b16 %v154
    %v260 = vunpack.c.h.b16 %v154
    %v261 = vunpack.c.l.b16 %v155
    %v262 = vunpack.c.h.b16 %v155
    %v263 = vunpack.c.l.b16 %v156
    %v264 = vunpack.c.h.b16 %v156
    %v265 = vunpack.c.l.b16 %v157
    %v266 = vunpack.c.h.b16 %v157
    %v267 = vunpack.c.l.b16 %v158
    %v268 = vunpack.c.h.b16 %v158
    %v269 = vunpack.c.l.b16 %v159
    %v270 = vunpack.c.h.b16 %v159
    %v271 = vunpack.c.l.b16 %v160
    %v272 = vunpack.c.h.b16 %v160
    %v273 = vunpack.c.l.b16 %v161
    %v274 = vunpack.c.h.b16 %v161
    %v275 = vunpack.c.l.b16 %v162
    %v276 = vunpack.c.h.b16 %v162
    %v277 = vunpack.c.l.b16 %v163
    %v278 = vunpack.c.h.b16 %v163
    %v279 = vunpack.c.l.b16 %v164
    %v280 = vunpack.c.h.b16 %v164
    %v281 = vunpack.c.l.b16 %v165
    %v282 = vunpack.c.h.b16 %v165
    %v283 = vunpack.c.l.b16 %v166
    %v284 = vunpack.c.h.b16 %v166
    %v285 = vunpack.c.l.b16 %v167
    %v286 = vunpack.c.h.b16 %v167
    %v287 = vunpack.c.l.b16 %v168
    %v288 = vunpack.c.h.b16 %v168
    %v289 = vunpack.c.l.b16 %v169
    %v290 = vunpack.c.h.b16 %v169
    %v291 = vunpack.c.l.b16 %v170
    %v292 = vunpack.c.h.b16 %v170
    %v293 = vunpack.c.l.b16 %v171
    %v294 = vunpack.c.h.b16 %v171
    %v295 = vunpack.c.l.b16 %v172
    %v296 = vunpack.c.h.b16 %v172
    %v297 = vunpack.c.l.b16 %v173
    %v298 = vunpack.c.h.b16 %v173
    %v299 = vunpack.c.l.b16 %v174
    %v300 = vunpack.c.h.b16 %v174
    %v301 = vunpack.c.l.b16 %v175
    %v302 = vunpack.c.h.b16 %v175
    %v303 = vunpack.c.l.b16 %v176
    %v304 = vunpack.c.h.b16 %v176
    %v305 = vpack.c.b16 %v243, %v241
    %v306 = vpack.c.b16 %v244, %v242
    %v307 = vpack.c.b16 %v247, %v245
    %v308 = vpack.c.b16 %v248, %v246
    %v309 = vpack.c.b16 %v251, %v249
    %v310 = vpack.c.b16 %v252, %v250
    %v311 = vpack.c.b16 %v255, %v253
    %v312 = vpack.c.b16 %v256, %v254
    %v313 = vpack.c.b16 %v259, %v257
    %v314 = vpack.c.b16 %v260, %v258
    %v315 = vpack.c.b16 %v263, %v261
    %v316 = vpack.c.b16 %v264, %v262
    %v317 = vpack.c.b16 %v267, %v265
    %v318 = vpack.c.b16 %v268, %v266
    %v319 = vpack.c.b16 %v271, %v269
    %v320 = vpack.c.b16 %v272, %v270
    %v321 = vpack.c.b16 %v275, %v273
    %v322 = vpack.c.b16 %v276, %v274
    %v323 = vpack.c.b16 %v279, %v277
    %v324 = vpack.c.b16 %v280, %v278
    %v325 = vpack.c.b16 %v283, %v281
    %v326 = vpack.c.b16 %v284, %v282
    %v327 = vpack.c.b16 %v287, %v285
    %v328 = vpack.c.b16 %v288, %v286
    %v329 = vpack.c.b16 %v291, %v289
    %v330 = vpack.c.b16 %v292, %v290
    %v331 = vpack.c.b16 %v295, %v293
    %v332 = vpack.c.b16 %v296, %v294
    %v333 = vpack.c.b16 %v299, %v297
    %v334 = vpack.c.b16 %v300, %v298
    %v335 = vpack.c.b16 %v303, %v301
    %v336 = vpack.c.b16 %v304, %v302
    %v401 = vunpack.c.l.b16 %v177
    %v402 = vunpack.c.l.b16 %v178
    %v403 = vunpack.c.l.b16 %v179
    %v404 = vunpack.c.l.b16 %v180
    %v405 = vunpack.c.l.b16 %v181
    %v406 = vunpack.c.l.b16 %v182
    %v407 = vunpack.c.l.b16 %v183
    %v408 = vunpack.c.l.b16 %v184
    %v409 = vunpack.c.l.b16 %v185
    %v410 = vunpack.c.l.b16 %v186
    %v411 = vunpack.c.l.b16 %v187
    %v412 = vunpack.c.l.b16 %v188
    %v413 = vunpack.c.l.b16 %v189
    %v414 = vunpack.c.l.b16 %v190
    %v415 = vunpack.c.l.b16 %v191
    %v416 = vunpack.c.l.b16 %v192
    %v417 = vunpack.c.l.b16 %v193
    %v418 = vunpack.c.l.b16 %v194
    %v419 = vunpack.c.l.b16 %v195
    %v420 = vunpack.c.l.b16 %v196
    %v421 = vunpack.c.l.b16 %v197
    %v422 = vunpack.c.l.b16 %v198
    %v423 = vunpack.c.l.b16 %v199
    %v424 = vunpack.c.l.b16 %v200
    %v425 = vunpack.c.l.b16 %v201
    %v426 = vunpack.c.l.b16 %v202
    %v427 = vunpack.c.l.b16 %v203
    %v428 = vunpack.c.l.b16 %v204
    %v429 = vunpack.c.l.b16 %v205
    %v430 = vunpack.c.l.b16 %v206
    %v431 = vunpack.c.l.b16 %v207
    %v432 = vunpack.c.l.b16 %v208
    %v433 = vpack.c.b16 %v402, %v401
    %v434 = vpack.c.b16 %v404, %v403
    %v435 = vpack.c.b16 %v406, %v405
    %v436 = vpack.c.b16 %v408, %v407
    %v437 = vpack.c.b16 %v410, %v409
    %v438 = vpack.c.b16 %v412, %v411
    %v439 = vpack.c.b16 %v414, %v413
    %v440 = vpack.c.b16 %v416, %v415
    %v441 = vpack.c.b16 %v418, %v417
    %v442 = vpack.c.b16 %v420, %v419
    %v443 = vpack.c.b16 %v422, %v421
    %v444 = vpack.c.b16 %v424, %v423
    %v445 = vpack.c.b16 %v426, %v425
    %v446 = vpack.c.b16 %v428, %v427
    %v447 = vpack.c.b16 %v430, %v429
    %v448 = vpack.c.b16 %v432, %v431
    %465 = vmatprep.subr.bf16.mxu0 0
    %466 = vmatpush1.bf16.msra.mxu0 %v440
    %467 = vmatprep.subr.bf16.mxu0 0
    %468 = vmatpush1.bf16.msra.mxu0 %v439
    %469 = vmatprep.subr.bf16.mxu0 0
    %470 = vmatpush1.bf16.msra.mxu0 %v438
    %471 = vmatprep.subr.bf16.mxu0 0
    %472 = vmatpush1.bf16.msra.mxu0 %v437
    %473 = vmatprep.subr.bf16.mxu0 0
    %474 = vmatpush1.bf16.msra.mxu0 %v436
    %475 = vmatprep.subr.bf16.mxu0 0
    %476 = vmatpush1.bf16.msra.mxu0 %v435
    %477 = vmatprep.subr.bf16.mxu0 0
    %478 = vmatpush1.bf16.msra.mxu0 %v434
    %479 = vmatprep.subr.bf16.mxu0 0
    %480 = vmatpush1.bf16.msra.mxu0 %v433
    %481 = vmatprep.subr.bf16.mxu0 0
    %482 = vmatpush2.bf16.msra.mxu0 %v448
    %483 = vmatprep.subr.bf16.mxu0 0
    %484 = vmatpush2.bf16.msra.mxu0 %v447
    %485 = vmatprep.subr.bf16.mxu0 0
    %486 = vmatpush2.bf16.msra.mxu0 %v446
    %487 = vmatprep.subr.bf16.mxu0 0
    %488 = vmatpush2.bf16.msra.mxu0 %v445
    %489 = vmatprep.subr.bf16.mxu0 0
    %490 = vmatpush2.bf16.msra.mxu0 %v444
    %491 = vmatprep.subr.bf16.mxu0 0
    %492 = vmatpush2.bf16.msra.mxu0 %v443
    %493 = vmatprep.subr.bf16.mxu0 0
    %494 = vmatpush2.bf16.msra.mxu0 %v442
    %495 = vmatprep.subr.bf16.mxu0 0
    %496 = vmatpush2.bf16.msra.mxu0 %v441
    %497 = vmatprep.mubr.bf16.mxu0 %v306
    %498 = vmatmul.mubr.bf16.gmra.mxu0 %v305
    %v499 = vpop.f32.mrf.mxu0
    %v500 = vadd.f32 0.0, %v499
    %v501 = vpop.f32.mrf.mxu0
    %v502 = vpop.f32.mrf.mxu0
    %v503 = vadd.f32 0.0, %v502
    %v504 = vpop.f32.mrf.mxu0
    %505 = vmatprep.mubr.bf16.mxu0 %v308
    %506 = vmatmul.mubr.bf16.gmra.mxu0 %v307
    %v507 = vpop.f32.mrf.mxu0
    %v508 = vadd.f32 0.0, %v507
    %v509 = vpop.f32.mrf.mxu0
    %v510 = vpop.f32.mrf.mxu0
    %v511 = vadd.f32 0.0, %v510
    %v512 = vpop.f32.mrf.mxu0
    %513 = vmatprep.mubr.bf16.mxu0 %v310
    %514 = vmatmul.mubr.bf16.gmra.mxu0 %v309
    %v515 = vpop.f32.mrf.mxu0
    %v516 = vadd.f32 0.0, %v515
    %v517 = vpop.f32.mrf.mxu0
    %v518 = vpop.f32.mrf.mxu0
    %v519 = vadd.f32 0.0, %v518
    %v520 = vpop.f32.mrf.mxu0
    %521 = vmatprep.mubr.bf16.mxu0 %v312
    %522 = vmatmul.mubr.bf16.gmra.mxu0 %v311
    %v523 = vpop.f32.mrf.mxu0
    %v524 = vadd.f32 0.0, %v523
    %v525 = vpop.f32.mrf.mxu0
    %v526 = vpop.f32.mrf.mxu0
    %v527 = vadd.f32 0.0, %v526
    %v528 = vpop.f32.mrf.mxu0
    %529 = vmatprep.mubr.bf16.mxu0 %v314
    %530 = vmatmul.mubr.bf16.gmra.mxu0 %v313
    %v531 = vpop.f32.mrf.mxu0
    %v532 = vadd.f32 0.0, %v531
    %v533 = vpop.f32.mrf.mxu0
    %v534 = vpop.f32.mrf.mxu0
    %v535 = vadd.f32 0.0, %v534
    %v536 = vpop.f32.mrf.mxu0
    %537 = vmatprep.mubr.bf16.mxu0 %v316
    %538 = vmatmul.mubr.bf16.gmra.mxu0 %v315
    %v539 = vpop.f32.mrf.mxu0
    %v540 = vadd.f32 0.0, %v539
    %v541 = vpop.f32.mrf.mxu0
    %v542 = vpop.f32.mrf.mxu0
    %v543 = vadd.f32 0.0, %v542
    %v544 = vpop.f32.mrf.mxu0
    %545 = vmatprep.mubr.bf16.mxu0 %v318
    %546 = vmatmul.mubr.bf16.gmra.mxu0 %v317
    %v547 = vpop.f32.mrf.mxu0
    %v548 = vadd.f32 0.0, %v547
    %v549 = vpop.f32.mrf.mxu0
    %v550 = vpop.f32.mrf.mxu0
    %v551 = vadd.f32 0.0, %v550
    %v552 = vpop.f32.mrf.mxu0
    %553 = vmatprep.mubr.bf16.mxu0 %v320
    %554 = vmatmul.mubr.bf16.gmra.mxu0 %v319
    %v555 = vpop.f32.mrf.mxu0
    %v556 = vadd.f32 0.0, %v555
    %v557 = vpop.f32.mrf.mxu0
    %v558 = vpop.f32.mrf.mxu0
    %v559 = vadd.f32 0.0, %v558
    %v560 = vpop.f32.mrf.mxu0
    %561 = vmatprep.mubr.bf16.mxu0 %v322
    %562 = vmatmul.mubr.bf16.gmra.mxu0 %v321
    %v563 = vpop.f32.mrf.mxu0
    %v564 = vadd.f32 0.0, %v563
    %v565 = vpop.f32.mrf.mxu0
    %v566 = vpop.f32.mrf.mxu0
    %v567 = vadd.f32 0.0, %v566
    %v568 = vpop.f32.mrf.mxu0
    %569 = vmatprep.mubr.bf16.mxu0 %v324
    %570 = vmatmul.mubr.bf16.gmra.mxu0 %v323
    %v571 = vpop.f32.mrf.mxu0
    %v572 = vadd.f32 0.0, %v571
    %v573 = vpop.f32.mrf.mxu0
    %v574 = vpop.f32.mrf.mxu0
    %v575 = vadd.f32 0.0, %v574
    %v576 = vpop.f32.mrf.mxu0
    %577 = vmatprep.mubr.bf16.mxu0 %v326
    %578 = vmatmul.mubr.bf16.gmra.mxu0 %v325
    %v579 = vpop.f32.mrf.mxu0
    %v580 = vadd.f32 0.0, %v579
    %v581 = vpop.f32.mrf.mxu0
    %v582 = vpop.f32.mrf.mxu0
    %v583 = vadd.f32 0.0, %v582
    %v584 = vpop.f32.mrf.mxu0
    %585 = vmatprep.mubr.bf16.mxu0 %v328
    %586 = vmatmul.mubr.bf16.gmra.mxu0 %v327
    %v587 = vpop.f32.mrf.mxu0
    %v588 = vadd.f32 0.0, %v587
    %v589 = vpop.f32.mrf.mxu0
    %v590 = vpop.f32.mrf.mxu0
    %v591 = vadd.f32 0.0, %v590
    %v592 = vpop.f32.mrf.mxu0
    %593 = vmatprep.mubr.bf16.mxu0 %v330
    %594 = vmatmul.mubr.bf16.gmra.mxu0 %v329
    %v595 = vpop.f32.mrf.mxu0
    %v596 = vadd.f32 0.0, %v595
    %v597 = vpop.f32.mrf.mxu0
    %v598 = vpop.f32.mrf.mxu0
    %v599 = vadd.f32 0.0, %v598
    %v600 = vpop.f32.mrf.mxu0
    %601 = vmatprep.mubr.bf16.mxu0 %v332
    %602 = vmatmul.mubr.bf16.gmra.mxu0 %v331
    %v603 = vpop.f32.mrf.mxu0
    %v604 = vadd.f32 0.0, %v603
    %v605 = vpop.f32.mrf.mxu0
    %v606 = vpop.f32.mrf.mxu0
    %v607 = vadd.f32 0.0, %v606
    %v608 = vpop.f32.mrf.mxu0
    %609 = vmatprep.mubr.bf16.mxu0 %v334
    %610 = vmatmul.mubr.bf16.gmra.mxu0 %v333
    %v611 = vpop.f32.mrf.mxu0
    %v612 = vadd.f32 0.0, %v611
    %v613 = vpop.f32.mrf.mxu0
    %v614 = vpop.f32.mrf.mxu0
    %v615 = vadd.f32 0.0, %v614
    %v616 = vpop.f32.mrf.mxu0
    %617 = vmatprep.mubr.bf16.mxu0 %v336
    %618 = vmatmul.mubr.bf16.gmra.mxu0 %v335
    %v619 = vpop.f32.mrf.mxu0
    %v620 = vadd.f32 0.0, %v619
    %v621 = vpop.f32.mrf.mxu0
    %v622 = vpop.f32.mrf.mxu0
    %v623 = vadd.f32 0.0, %v622
    %v624 = vpop.f32.mrf.mxu0
    %625 = vdwg.mxu0
    %v626 = vadd.f32 %v113, %v500
    %v627 = vadd.f32 %v114, %v503
    %v628 = vadd.f32 %v115, %v508
    %v629 = vadd.f32 %v116, %v511
    %v630 = vadd.f32 %v117, %v516
    %v631 = vadd.f32 %v118, %v519
    %v632 = vadd.f32 %v119, %v524
    %v633 = vadd.f32 %v120, %v527
    %v634 = vadd.f32 %v121, %v532
    %v635 = vadd.f32 %v122, %v535
    %v636 = vadd.f32 %v123, %v540
    %v637 = vadd.f32 %v124, %v543
    %v638 = vadd.f32 %v125, %v548
    %v639 = vadd.f32 %v126, %v551
    %v640 = vadd.f32 %v127, %v556
    %v641 = vadd.f32 %v128, %v559
    %v642 = vadd.f32 %v129, %v564
    %v643 = vadd.f32 %v130, %v567
    %v644 = vadd.f32 %v131, %v572
    %v645 = vadd.f32 %v132, %v575
    %v646 = vadd.f32 %v133, %v580
    %v647 = vadd.f32 %v134, %v583
    %v648 = vadd.f32 %v135, %v588
    %v649 = vadd.f32 %v136, %v591
    %v650 = vadd.f32 %v137, %v596
    %v651 = vadd.f32 %v138, %v599
    %v652 = vadd.f32 %v139, %v604
    %v653 = vadd.f32 %v140, %v607
    %v654 = vadd.f32 %v141, %v612
    %v655 = vadd.f32 %v142, %v615
    %v656 = vadd.f32 %v143, %v620
    %v657 = vadd.f32 %v144, %v623
    %658 = vst [vmem:[#allocation2] sm:$0xff] %v626
    %659 = vst [vmem:[#allocation2 + $0x8] sm:$0xff] %v627
    %660 = vst [vmem:[#allocation2 + $0x10] sm:$0xff] %v628
    %661 = vst [vmem:[#allocation2 + $0x18] sm:$0xff] %v629
    %662 = vst [vmem:[#allocation2 + $0x20] sm:$0xff] %v630
    %663 = vst [vmem:[#allocation2 + $0x28] sm:$0xff] %v631
    %664 = vst [vmem:[#allocation2 + $0x30] sm:$0xff] %v632
    %665 = vst [vmem:[#allocation2 + $0x38] sm:$0xff] %v633
    %666 = vst [vmem:[#allocation2 + $0x40] sm:$0xff] %v634
    %667 = vst [vmem:[#allocation2 + $0x48] sm:$0xff] %v635
    %668 = vst [vmem:[#allocation2 + $0x50] sm:$0xff] %v636
    %669 = vst [vmem:[#allocation2 + $0x58] sm:$0xff] %v637
    %670 = vst [vmem:[#allocation2 + $0x60] sm:$0xff] %v638
    %671 = vst [vmem:[#allocation2 + $0x68] sm:$0xff] %v639
    %672 = vst [vmem:[#allocation2 + $0x70] sm:$0xff] %v640
    %673 = vst [vmem:[#allocation2 + $0x78] sm:$0xff] %v641
    %674 = vst [vmem:[#allocation2 + $0x80] sm:$0xff] %v642
    %675 = vst [vmem:[#allocation2 + $0x88] sm:$0xff] %v643
    %676 = vst [vmem:[#allocation2 + $0x90] sm:$0xff] %v644
    %677 = vst [vmem:[#allocation2 + $0x98] sm:$0xff] %v645
    %678 = vst [vmem:[#allocation2 + $0xa0] sm:$0xff] %v646
    %679 = vst [vmem:[#allocation2 + $0xa8] sm:$0xff] %v647
    %680 = vst [vmem:[#allocation2 + $0xb0] sm:$0xff] %v648
    %681 = vst [vmem:[#allocation2 + $0xb8] sm:$0xff] %v649
    %682 = vst [vmem:[#allocation2 + $0xc0] sm:$0xff] %v650
    %683 = vst [vmem:[#allocation2 + $0xc8] sm:$0xff] %v651
    %684 = vst [vmem:[#allocation2 + $0xd0] sm:$0xff] %v652
    %685 = vst [vmem:[#allocation2 + $0xd8] sm:$0xff] %v653
    %686 = vst [vmem:[#allocation2 + $0xe0] sm:$0xff] %v654
    %687 = vst [vmem:[#allocation2 + $0xe8] sm:$0xff] %v655
    %688 = vst [vmem:[#allocation2 + $0xf0] sm:$0xff] %v656
    %689 = vst [vmem:[#allocation2 + $0xf8] sm:$0xff] %v657
    // Predicated region
    $region42: #{tpu_custom_call.1} parent=1 // pred_check
      %p690 = pneg %p77
    $region43: #{tpu_custom_call.1} parent=1 // pred_check_branch
      %692 = sbr.rel (%p690) target = $region45
    $region44: #{tpu_custom_call.1} parent=1 // pred_region
      %v693 = vld [vmem:[#allocation2] sm:$0xff]
      %v694 = vld [vmem:[#allocation2 + $0x8] sm:$0xff]
      %v695 = vld [vmem:[#allocation2 + $0x10] sm:$0xff]
      %v696 = vld [vmem:[#allocation2 + $0x18] sm:$0xff]
      %v697 = vld [vmem:[#allocation2 + $0x20] sm:$0xff]
      %v698 = vld [vmem:[#allocation2 + $0x28] sm:$0xff]
      %v699 = vld [vmem:[#allocation2 + $0x30] sm:$0xff]
      %v700 = vld [vmem:[#allocation2 + $0x38] sm:$0xff]
      %v701 = vld [vmem:[#allocation2 + $0x40] sm:$0xff]
      %v702 = vld [vmem:[#allocation2 + $0x48] sm:$0xff]
      %v703 = vld [vmem:[#allocation2 + $0x50] sm:$0xff]
      %v704 = vld [vmem:[#allocation2 + $0x58] sm:$0xff]
      %v705 = vld [vmem:[#allocation2 + $0x60] sm:$0xff]
      %v706 = vld [vmem:[#allocation2 + $0x68] sm:$0xff]
      %v707 = vld [vmem:[#allocation2 + $0x70] sm:$0xff]
      %v708 = vld [vmem:[#allocation2 + $0x78] sm:$0xff]
      %v709 = vld [vmem:[#allocation2 + $0x80] sm:$0xff]
      %v710 = vld [vmem:[#allocation2 + $0x88] sm:$0xff]
      %v711 = vld [vmem:[#allocation2 + $0x90] sm:$0xff]
      %v712 = vld [vmem:[#allocation2 + $0x98] sm:$0xff]
      %v713 = vld [vmem:[#allocation2 + $0xa0] sm:$0xff]
      %v714 = vld [vmem:[#allocation2 + $0xa8] sm:$0xff]
      %v715 = vld [vmem:[#allocation2 + $0xb0] sm:$0xff]
      %v716 = vld [vmem:[#allocation2 + $0xb8] sm:$0xff]
      %v717 = vld [vmem:[#allocation2 + $0xc0] sm:$0xff]
      %v718 = vld [vmem:[#allocation2 + $0xc8] sm:$0xff]
      %v719 = vld [vmem:[#allocation2 + $0xd0] sm:$0xff]
      %v720 = vld [vmem:[#allocation2 + $0xd8] sm:$0xff]
      %v721 = vld [vmem:[#allocation2 + $0xe0] sm:$0xff]
      %v722 = vld [vmem:[#allocation2 + $0xe8] sm:$0xff]
      %v723 = vld [vmem:[#allocation2 + $0xf0] sm:$0xff]
      %v724 = vld [vmem:[#allocation2 + $0xf8] sm:$0xff]
      %v725 = vld [vmem:[#allocation8] sm:$0xff]
      %v726 = vld [vmem:[#allocation8 + $0x8] sm:$0xff]
      %v727 = vld [vmem:[#allocation8 + $0x10] sm:$0xff]
      %v728 = vld [vmem:[#allocation8 + $0x18] sm:$0xff]
      %v729 = vld [vmem:[#allocation8 + $0x20] sm:$0xff]
      %v730 = vld [vmem:[#allocation8 + $0x28] sm:$0xff]
      %v731 = vld [vmem:[#allocation8 + $0x30] sm:$0xff]
      %v732 = vld [vmem:[#allocation8 + $0x38] sm:$0xff]
      %v733 = vld [vmem:[#allocation8 + $0x40] sm:$0xff]
      %v734 = vld [vmem:[#allocation8 + $0x48] sm:$0xff]
      %v735 = vld [vmem:[#allocation8 + $0x50] sm:$0xff]
      %v736 = vld [vmem:[#allocation8 + $0x58] sm:$0xff]
      %v737 = vld [vmem:[#allocation8 + $0x60] sm:$0xff]
      %v738 = vld [vmem:[#allocation8 + $0x68] sm:$0xff]
      %v739 = vld [vmem:[#allocation8 + $0x70] sm:$0xff]
      %v740 = vld [vmem:[#allocation8 + $0x78] sm:$0xff]
      %v741 = vld [vmem:[#allocation8 + $0x80] sm:$0xff]
      %v742 = vld [vmem:[#allocation8 + $0x88] sm:$0xff]
      %v743 = vld [vmem:[#allocation8 + $0x90] sm:$0xff]
      %v744 = vld [vmem:[#allocation8 + $0x98] sm:$0xff]
      %v745 = vld [vmem:[#allocation8 + $0xa0] sm:$0xff]
      %v746 = vld [vmem:[#allocation8 + $0xa8] sm:$0xff]
      %v747 = vld [vmem:[#allocation8 + $0xb0] sm:$0xff]
      %v748 = vld [vmem:[#allocation8 + $0xb8] sm:$0xff]
      %v749 = vld [vmem:[#allocation8 + $0xc0] sm:$0xff]
      %v750 = vld [vmem:[#allocation8 + $0xc8] sm:$0xff]
      %v751 = vld [vmem:[#allocation8 + $0xd0] sm:$0xff]
      %v752 = vld [vmem:[#allocation8 + $0xd8] sm:$0xff]
      %v753 = vld [vmem:[#allocation8 + $0xe0] sm:$0xff]
      %v754 = vld [vmem:[#allocation8 + $0xe8] sm:$0xff]
      %v755 = vld [vmem:[#allocation8 + $0xf0] sm:$0xff]
      %v756 = vld [vmem:[#allocation8 + $0xf8] sm:$0xff]
      %v757 = vld [vmem:[#allocation9] sm:$0xff]
      %v758 = vld [vmem:[#allocation9 + $0x8] sm:$0xff]
      %v759 = vld [vmem:[#allocation9 + $0x10] sm:$0xff]
      %v760 = vld [vmem:[#allocation9 + $0x18] sm:$0xff]
      %v761 = vld [vmem:[#allocation9 + $0x20] sm:$0xff]
      %v762 = vld [vmem:[#allocation9 + $0x28] sm:$0xff]
      %v763 = vld [vmem:[#allocation9 + $0x30] sm:$0xff]
      %v764 = vld [vmem:[#allocation9 + $0x38] sm:$0xff]
      %v765 = vld [vmem:[#allocation9 + $0x40] sm:$0xff]
      %v766 = vld [vmem:[#allocation9 + $0x48] sm:$0xff]
      %v767 = vld [vmem:[#allocation9 + $0x50] sm:$0xff]
      %v768 = vld [vmem:[#allocation9 + $0x58] sm:$0xff]
      %v769 = vld [vmem:[#allocation9 + $0x60] sm:$0xff]
      %v770 = vld [vmem:[#allocation9 + $0x68] sm:$0xff]
      %v771 = vld [vmem:[#allocation9 + $0x70] sm:$0xff]
      %v772 = vld [vmem:[#allocation9 + $0x78] sm:$0xff]
      %v773 = vld [vmem:[#allocation9 + $0x80] sm:$0xff]
      %v774 = vld [vmem:[#allocation9 + $0x88] sm:$0xff]
      %v775 = vld [vmem:[#allocation9 + $0x90] sm:$0xff]
      %v776 = vld [vmem:[#allocation9 + $0x98] sm:$0xff]
      %v777 = vld [vmem:[#allocation9 + $0xa0] sm:$0xff]
      %v778 = vld [vmem:[#allocation9 + $0xa8] sm:$0xff]
      %v779 = vld [vmem:[#allocation9 + $0xb0] sm:$0xff]
      %v780 = vld [vmem:[#allocation9 + $0xb8] sm:$0xff]
      %v781 = vld [vmem:[#allocation9 + $0xc0] sm:$0xff]
      %v782 = vld [vmem:[#allocation9 + $0xc8] sm:$0xff]
      %v783 = vld [vmem:[#allocation9 + $0xd0] sm:$0xff]
      %v784 = vld [vmem:[#allocation9 + $0xd8] sm:$0xff]
      %v785 = vld [vmem:[#allocation9 + $0xe0] sm:$0xff]
      %v786 = vld [vmem:[#allocation9 + $0xe8] sm:$0xff]
      %v787 = vld [vmem:[#allocation9 + $0xf0] sm:$0xff]
      %v788 = vld [vmem:[#allocation9 + $0xf8] sm:$0xff]
      %v789 = vld [vmem:[%s4] sm:$0x1]
      %v791 = vlaneseq
      %v792 = vshrl.u32 %v791, 7
      %v793 = vsub.s32 0, %v792
      %v794 = vrot.slane %v789, %v793
      %796 = vmatprep.subr.mxu0 0.0
      %797 = vmatpush1.msra.mxu0 %v772
      %798 = vmatprep.subr.mxu0 0.0
      %799 = vmatpush1.msra.mxu0 %v771
      %800 = vmatprep.subr.mxu0 0.0
      %801 = vmatpush1.msra.mxu0 %v770
      %802 = vmatprep.subr.mxu0 0.0
      %803 = vmatpush1.msra.mxu0 %v769
      %804 = vmatprep.subr.mxu0 0.0
      %805 = vmatpush1.msra.mxu0 %v768
      %806 = vmatprep.subr.mxu0 0.0
      %807 = vmatpush1.msra.mxu0 %v767
      %808 = vmatprep.subr.mxu0 0.0
      %809 = vmatpush1.msra.mxu0 %v766
      %810 = vmatprep.subr.mxu0 0.0
      %811 = vmatpush1.msra.mxu0 %v765
      %812 = vmatprep.subr.mxu0 0.0
      %813 = vmatpush1.msra.mxu0 %v764
      %814 = vmatprep.subr.mxu0 0.0
      %815 = vmatpush1.msra.mxu0 %v763
      %816 = vmatprep.subr.mxu0 0.0
      %817 = vmatpush1.msra.mxu0 %v762
      %818 = vmatprep.subr.mxu0 0.0
      %819 = vmatpush1.msra.mxu0 %v761
      %820 = vmatprep.subr.mxu0 0.0
      %821 = vmatpush1.msra.mxu0 %v760
      %822 = vmatprep.subr.mxu0 0.0
      %823 = vmatpush1.msra.mxu0 %v759
      %824 = vmatprep.subr.mxu0 0.0
      %825 = vmatpush1.msra.mxu0 %v758
      %826 = vmatprep.subr.mxu0 0.0
      %827 = vmatpush1.msra.mxu0 %v757
      %828 = vmatprep.subr.mxu0 0.0
      %829 = vmatpush2.msra.mxu0 %v788
      %830 = vmatprep.subr.mxu0 0.0
      %831 = vmatpush2.msra.mxu0 %v787
      %832 = vmatprep.subr.mxu0 0.0
      %833 = vmatpush2.msra.mxu0 %v786
      %834 = vmatprep.subr.mxu0 0.0
      %835 = vmatpush2.msra.mxu0 %v785
      %836 = vmatprep.subr.mxu0 0.0
      %837 = vmatpush2.msra.mxu0 %v784
      %838 = vmatprep.subr.mxu0 0.0
      %839 = vmatpush2.msra.mxu0 %v783
      %840 = vmatprep.subr.mxu0 0.0
      %841 = vmatpush2.msra.mxu0 %v782
      %842 = vmatprep.subr.mxu0 0.0
      %843 = vmatpush2.msra.mxu0 %v781
      %844 = vmatprep.subr.mxu0 0.0
      %845 = vmatpush2.msra.mxu0 %v780
      %846 = vmatprep.subr.mxu0 0.0
      %847 = vmatpush2.msra.mxu0 %v779
      %848 = vmatprep.subr.mxu0 0.0
      %849 = vmatpush2.msra.mxu0 %v778
      %850 = vmatprep.subr.mxu0 0.0
      %851 = vmatpush2.msra.mxu0 %v777
      %852 = vmatprep.subr.mxu0 0.0
      %853 = vmatpush2.msra.mxu0 %v776
      %854 = vmatprep.subr.mxu0 0.0
      %855 = vmatpush2.msra.mxu0 %v775
      %856 = vmatprep.subr.mxu0 0.0
      %857 = vmatpush2.msra.mxu0 %v774
      %858 = vmatprep.subr.mxu0 0.0
      %859 = vmatpush2.msra.mxu0 %v773
      %860 = vmatprep.mubr.f32.mxu0 %v725
      %861 = vmatmul.mubr.f32.gmra.mxu0 %v693
      %v862 = vpop.f32.mrf.mxu0
      %v863 = vadd.f32 %v794, %v862
      %v864 = vpop.f32.mrf.mxu0
      %865 = vmatprep.mubr.f32.mxu0 %v726
      %866 = vmatmul.mubr.f32.gmra.mxu0 %v694
      %v867 = vpop.f32.mrf.mxu0
      %v868 = vadd.f32 %v794, %v867
      %v869 = vpop.f32.mrf.mxu0
      %870 = vmatprep.mubr.f32.mxu0 %v727
      %871 = vmatmul.mubr.f32.gmra.mxu0 %v695
      %v872 = vpop.f32.mrf.mxu0
      %v873 = vadd.f32 %v794, %v872
      %v874 = vpop.f32.mrf.mxu0
      %875 = vmatprep.mubr.f32.mxu0 %v728
      %876 = vmatmul.mubr.f32.gmra.mxu0 %v696
      %v877 = vpop.f32.mrf.mxu0
      %v878 = vadd.f32 %v794, %v877
      %v879 = vpop.f32.mrf.mxu0
      %880 = vmatprep.mubr.f32.mxu0 %v729
      %881 = vmatmul.mubr.f32.gmra.mxu0 %v697
      %v882 = vpop.f32.mrf.mxu0
      %v883 = vadd.f32 %v794, %v882
      %v884 = vpop.f32.mrf.mxu0
      %885 = vmatprep.mubr.f32.mxu0 %v730
      %886 = vmatmul.mubr.f32.gmra.mxu0 %v698
      %v887 = vpop.f32.mrf.mxu0
      %v888 = vadd.f32 %v794, %v887
      %v889 = vpop.f32.mrf.mxu0
      %890 = vmatprep.mubr.f32.mxu0 %v731
      %891 = vmatmul.mubr.f32.gmra.mxu0 %v699
      %v892 = vpop.f32.mrf.mxu0
      %v893 = vadd.f32 %v794, %v892
      %v894 = vpop.f32.mrf.mxu0
      %895 = vmatprep.mubr.f32.mxu0 %v732
      %896 = vmatmul.mubr.f32.gmra.mxu0 %v700
      %v897 = vpop.f32.mrf.mxu0
      %v898 = vadd.f32 %v794, %v897
      %v899 = vpop.f32.mrf.mxu0
      %900 = vmatprep.mubr.f32.mxu0 %v733
      %901 = vmatmul.mubr.f32.gmra.mxu0 %v701
      %v902 = vpop.f32.mrf.mxu0
      %v903 = vadd.f32 %v794, %v902
      %v904 = vpop.f32.mrf.mxu0
      %905 = vmatprep.mubr.f32.mxu0 %v734
      %906 = vmatmul.mubr.f32.gmra.mxu0 %v702
      %v907 = vpop.f32.mrf.mxu0
      %v908 = vadd.f32 %v794, %v907
      %v909 = vpop.f32.mrf.mxu0
      %910 = vmatprep.mubr.f32.mxu0 %v735
      %911 = vmatmul.mubr.f32.gmra.mxu0 %v703
      %v912 = vpop.f32.mrf.mxu0
      %v913 = vadd.f32 %v794, %v912
      %v914 = vpop.f32.mrf.mxu0
      %915 = vmatprep.mubr.f32.mxu0 %v736
      %916 = vmatmul.mubr.f32.gmra.mxu0 %v704
      %v917 = vpop.f32.mrf.mxu0
      %v918 = vadd.f32 %v794, %v917
      %v919 = vpop.f32.mrf.mxu0
      %920 = vmatprep.mubr.f32.mxu0 %v737
      %921 = vmatmul.mubr.f32.gmra.mxu0 %v705
      %v922 = vpop.f32.mrf.mxu0
      %v923 = vadd.f32 %v794, %v922
      %v924 = vpop.f32.mrf.mxu0
      %925 = vmatprep.mubr.f32.mxu0 %v738
      %926 = vmatmul.mubr.f32.gmra.mxu0 %v706
      %v927 = vpop.f32.mrf.mxu0
      %v928 = vadd.f32 %v794, %v927
      %v929 = vpop.f32.mrf.mxu0
      %930 = vmatprep.mubr.f32.mxu0 %v739
      %931 = vmatmul.mubr.f32.gmra.mxu0 %v707
      %v932 = vpop.f32.mrf.mxu0
      %v933 = vadd.f32 %v794, %v932
      %v934 = vpop.f32.mrf.mxu0
      %935 = vmatprep.mubr.f32.mxu0 %v740
      %936 = vmatmul.mubr.f32.gmra.mxu0 %v708
      %v937 = vpop.f32.mrf.mxu0
      %v938 = vadd.f32 %v794, %v937
      %v939 = vpop.f32.mrf.mxu0
      %940 = vmatprep.mubr.f32.mxu0 %v741
      %941 = vmatmul.mubr.f32.gmra.mxu0 %v709
      %v942 = vpop.f32.mrf.mxu0
      %v943 = vadd.f32 %v794, %v942
      %v944 = vpop.f32.mrf.mxu0
      %945 = vmatprep.mubr.f32.mxu0 %v742
      %946 = vmatmul.mubr.f32.gmra.mxu0 %v710
      %v947 = vpop.f32.mrf.mxu0
      %v948 = vadd.f32 %v794, %v947
      %v949 = vpop.f32.mrf.mxu0
      %950 = vmatprep.mubr.f32.mxu0 %v743
      %951 = vmatmul.mubr.f32.gmra.mxu0 %v711
      %v952 = vpop.f32.mrf.mxu0
      %v953 = vadd.f32 %v794, %v952
      %v954 = vpop.f32.mrf.mxu0
      %955 = vmatprep.mubr.f32.mxu0 %v744
      %956 = vmatmul.mubr.f32.gmra.mxu0 %v712
      %v957 = vpop.f32.mrf.mxu0
      %v958 = vadd.f32 %v794, %v957
      %v959 = vpop.f32.mrf.mxu0
      %960 = vmatprep.mubr.f32.mxu0 %v745
      %961 = vmatmul.mubr.f32.gmra.mxu0 %v713
      %v962 = vpop.f32.mrf.mxu0
      %v963 = vadd.f32 %v794, %v962
      %v964 = vpop.f32.mrf.mxu0
      %965 = vmatprep.mubr.f32.mxu0 %v746
      %966 = vmatmul.mubr.f32.gmra.mxu0 %v714
      %v967 = vpop.f32.mrf.mxu0
      %v968 = vadd.f32 %v794, %v967
      %v969 = vpop.f32.mrf.mxu0
      %970 = vmatprep.mubr.f32.mxu0 %v747
      %971 = vmatmul.mubr.f32.gmra.mxu0 %v715
      %v972 = vpop.f32.mrf.mxu0
      %v973 = vadd.f32 %v794, %v972
      %v974 = vpop.f32.mrf.mxu0
      %975 = vmatprep.mubr.f32.mxu0 %v748
      %976 = vmatmul.mubr.f32.gmra.mxu0 %v716
      %v977 = vpop.f32.mrf.mxu0
      %v978 = vadd.f32 %v794, %v977
      %v979 = vpop.f32.mrf.mxu0
      %980 = vmatprep.mubr.f32.mxu0 %v749
      %981 = vmatmul.mubr.f32.gmra.mxu0 %v717
      %v982 = vpop.f32.mrf.mxu0
      %v983 = vadd.f32 %v794, %v982
      %v984 = vpop.f32.mrf.mxu0
      %985 = vmatprep.mubr.f32.mxu0 %v750
      %986 = vmatmul.mubr.f32.gmra.mxu0 %v718
      %v987 = vpop.f32.mrf.mxu0
      %v988 = vadd.f32 %v794, %v987
      %v989 = vpop.f32.mrf.mxu0
      %990 = vmatprep.mubr.f32.mxu0 %v751
      %991 = vmatmul.mubr.f32.gmra.mxu0 %v719
      %v992 = vpop.f32.mrf.mxu0
      %v993 = vadd.f32 %v794, %v992
      %v994 = vpop.f32.mrf.mxu0
      %995 = vmatprep.mubr.f32.mxu0 %v752
      %996 = vmatmul.mubr.f32.gmra.mxu0 %v720
      %v997 = vpop.f32.mrf.mxu0
      %v998 = vadd.f32 %v794, %v997
      %v999 = vpop.f32.mrf.mxu0
      %1000 = vmatprep.mubr.f32.mxu0 %v753
      %1001 = vmatmul.mubr.f32.gmra.mxu0 %v721
      %v1002 = vpop.f32.mrf.mxu0
      %v1003 = vadd.f32 %v794, %v1002
      %v1004 = vpop.f32.mrf.mxu0
      %1005 = vmatprep.mubr.f32.mxu0 %v754
      %1006 = vmatmul.mubr.f32.gmra.mxu0 %v722
      %v1007 = vpop.f32.mrf.mxu0
      %v1008 = vadd.f32 %v794, %v1007
      %v1009 = vpop.f32.mrf.mxu0
      %1010 = vmatprep.mubr.f32.mxu0 %v755
      %1011 = vmatmul.mubr.f32.gmra.mxu0 %v723
      %v1012 = vpop.f32.mrf.mxu0
      %v1013 = vadd.f32 %v794, %v1012
      %v1014 = vpop.f32.mrf.mxu0
      %1015 = vmatprep.mubr.f32.mxu0 %v756
      %1016 = vmatmul.mubr.f32.gmra.mxu0 %v724
      %v1017 = vpop.f32.mrf.mxu0
      %v1018 = vadd.f32 %v794, %v1017
      %v1019 = vpop.f32.mrf.mxu0
      %1020 = vdwg.mxu0
      %v1021 = vmax.f32 %v863, 0.0
      %v1022 = vmax.f32 %v868, 0.0
      %v1023 = vmax.f32 %v873, 0.0
      %v1024 = vmax.f32 %v878, 0.0
      %v1025 = vmax.f32 %v883, 0.0
      %v1026 = vmax.f32 %v888, 0.0
      %v1027 = vmax.f32 %v893, 0.0
      %v1028 = vmax.f32 %v898, 0.0
      %v1029 = vmax.f32 %v903, 0.0
      %v1030 = vmax.f32 %v908, 0.0
      %v1031 = vmax.f32 %v913, 0.0
      %v1032 = vmax.f32 %v918, 0.0
      %v1033 = vmax.f32 %v923, 0.0
      %v1034 = vmax.f32 %v928, 0.0
      %v1035 = vmax.f32 %v933, 0.0
      %v1036 = vmax.f32 %v938, 0.0
      %v1037 = vmax.f32 %v943, 0.0
      %v1038 = vmax.f32 %v948, 0.0
      %v1039 = vmax.f32 %v953, 0.0
      %v1040 = vmax.f32 %v958, 0.0
      %v1041 = vmax.f32 %v963, 0.0
      %v1042 = vmax.f32 %v968, 0.0
      %v1043 = vmax.f32 %v973, 0.0
      %v1044 = vmax.f32 %v978, 0.0
      %v1045 = vmax.f32 %v983, 0.0
      %v1046 = vmax.f32 %v988, 0.0
      %v1047 = vmax.f32 %v993, 0.0
      %v1048 = vmax.f32 %v998, 0.0
      %v1049 = vmax.f32 %v1003, 0.0
      %v1050 = vmax.f32 %v1008, 0.0
      %v1051 = vmax.f32 %v1013, 0.0
      %v1052 = vmax.f32 %v1018, 0.0
      %1053 = vst [vmem:[#allocation11] sm:$0xff] %v1021
      %1054 = vst [vmem:[#allocation11 + $0x8] sm:$0xff] %v1022
      %1055 = vst [vmem:[#allocation11 + $0x10] sm:$0xff] %v1023
      %1056 = vst [vmem:[#allocation11 + $0x18] sm:$0xff] %v1024
      %1057 = vst [vmem:[#allocation11 + $0x20] sm:$0xff] %v1025
      %1058 = vst [vmem:[#allocation11 + $0x28] sm:$0xff] %v1026
      %1059 = vst [vmem:[#allocation11 + $0x30] sm:$0xff] %v1027
      %1060 = vst [vmem:[#allocation11 + $0x38] sm:$0xff] %v1028
      %1061 = vst [vmem:[#allocation11 + $0x40] sm:$0xff] %v1029
      %1062 = vst [vmem:[#allocation11 + $0x48] sm:$0xff] %v1030
      %1063 = vst [vmem:[#allocation11 + $0x50] sm:$0xff] %v1031
      %1064 = vst [vmem:[#allocation11 + $0x58] sm:$0xff] %v1032
      %1065 = vst [vmem:[#allocation11 + $0x60] sm:$0xff] %v1033
      %1066 = vst [vmem:[#allocation11 + $0x68] sm:$0xff] %v1034
      %1067 = vst [vmem:[#allocation11 + $0x70] sm:$0xff] %v1035
      %1068 = vst [vmem:[#allocation11 + $0x78] sm:$0xff] %v1036
      %1069 = vst [vmem:[#allocation11 + $0x80] sm:$0xff] %v1037
      %1070 = vst [vmem:[#allocation11 + $0x88] sm:$0xff] %v1038
      %1071 = vst [vmem:[#allocation11 + $0x90] sm:$0xff] %v1039
      %1072 = vst [vmem:[#allocation11 + $0x98] sm:$0xff] %v1040
      %1073 = vst [vmem:[#allocation11 + $0xa0] sm:$0xff] %v1041
      %1074 = vst [vmem:[#allocation11 + $0xa8] sm:$0xff] %v1042
      %1075 = vst [vmem:[#allocation11 + $0xb0] sm:$0xff] %v1043
      %1076 = vst [vmem:[#allocation11 + $0xb8] sm:$0xff] %v1044
      %1077 = vst [vmem:[#allocation11 + $0xc0] sm:$0xff] %v1045
      %1078 = vst [vmem:[#allocation11 + $0xc8] sm:$0xff] %v1046
      %1079 = vst [vmem:[#allocation11 + $0xd0] sm:$0xff] %v1047
      %1080 = vst [vmem:[#allocation11 + $0xd8] sm:$0xff] %v1048
      %1081 = vst [vmem:[#allocation11 + $0xe0] sm:$0xff] %v1049
      %1082 = vst [vmem:[#allocation11 + $0xe8] sm:$0xff] %v1050
      %1083 = vst [vmem:[#allocation11 + $0xf0] sm:$0xff] %v1051
      %1084 = vst [vmem:[#allocation11 + $0xf8] sm:$0xff] %v1052
    $region45: #{tpu_custom_call.1} parent=1 // pred_fallthru
      _
    // Predicated region
    $region46: #{tpu_custom_call.1} parent=1 // pred_check
      _
    $region47: #{tpu_custom_call.1} parent=1 // pred_check_branch
      %1086 = sbr.rel (0) target = $region49
    $region48: #{tpu_custom_call.1} parent=1 // pred_region
      %s1088 = ssub.s32 4096, 4096
      %1089 = vsyncadd [#allocation5], %s1088
      %s1090 = sshll.u32 [#allocation11], 4
      %s1091 = int_to_ptr.vmem [resolvable:$true] %s1090
      %1096 = dma.vmem_to_hbm [thread:$0]  %s1091, 4096, %s5, [#allocation5], 128, 128, 8
    $region49: #{tpu_custom_call.1} parent=1 // pred_fallthru
      _
    // Predicated region
    $region50: #{tpu_custom_call.1} parent=1 // pred_check
      _
    $region51: #{tpu_custom_call.1} parent=1 // pred_check_branch
      %1098 = sbr.rel (0) target = $region53
    $region52: #{tpu_custom_call.1} parent=1 // pred_region
      %1099 = dma.done [#allocation5], 4096
    $region53: #{tpu_custom_call.1} parent=1 // pred_fallthru
      _
    %1100 = vsyncpa [#allocation4], 1
    %1101 = vsyncpa [#allocation7], 1
    %1102 = vsyncpa [#allocation10], 1
    %1103 = vsyncpa [#allocation5], 1

</llo_original>
